<compile_context>
chip_gen: v7x
topology: tpu7x:2x2x1
jax: 0.10.0
libtpu: 0.0.40
codegen_flags: <defaults>
</compile_context>

<pallas_src>
from functools import partial

import jax
import jax.numpy as jnp
from jax.experimental import pallas as pl
from jax.experimental.pallas import tpu as pltpu

EPS = 0.01
_NSPLIT = 3                           # bf16 components per f32 table entry (exact gather)
_MAX_TABLE_BYTES = 2 * 1024 * 1024    # cap resident stats-table footprint (v7x VMEM)
_X_TILE_BYTES = 2 * 1024 * 1024       # per-step x-tile budget (HBM roofline sweet spot)
_BLOCK_ROWS_CAP = 2048
_MIN_GRID_STEPS = 4                   # keep both v7x TCs fed / DMA pipeline overlapped


def _round_up(x, m):
    return ((x + m - 1) // m) * m


def _norm_kernel(tid_ref, x_ref, tab_ref, o_ref, *, pack, width, nsplit, center):
    """Normalize one (block_rows, width) tile of packed env rows.

    tid_ref : (block_rows, pack) int32     shifted task id per packed position
                                           (tid + p*tasks_p, disjoint per p)
    x_ref   : (block_rows, width)          `pack` env rows folded per lane row
    tab_ref : (P, nsplit*ncomp*width) bf16 resident stats table,
              lanes = [inv_hi|inv_mid|inv_lo | (mean_hi|mean_mid|mean_lo)]
    o_ref   : (block_rows, width)
    """
    rows = x_ref.shape[0]
    p_cols = tab_ref.shape[0]
    iota = jax.lax.broadcasted_iota(jnp.int32, (rows, p_cols), 1)

    # One-hot over the pack*tasks_p table rows.  Each packed position p matches
    # inside its own disjoint [p*tasks_p, (p+1)*tasks_p) block, so OR == sum.
    oh = tid_ref[:, 0:1] == iota
    for p in range(1, pack):                      # static, tiny
        oh = jnp.logical_or(oh, tid_ref[:, p:p + 1] == iota)
    oh = oh.astype(jnp.float32).astype(jnp.bfloat16)   # exact 0/1 in bf16

    # Single DEFAULT-precision MXU pass gathers every split of every stat.
    g = jnp.dot(oh, tab_ref[...], preferred_element_type=jnp.float32)

    inv = g[:, 0:width]
    for s in range(1, nsplit):
        inv = inv + g[:, s * width:(s + 1) * width]

    xf = x_ref[...].astype(jnp.float32)           # VPU math in f32 (v5e has no bf16 VPU)
    if center:
        off = nsplit * width
        mean = g[:, off:off + width]
        for s in range(1, nsplit):
            mean = mean + g[:, off + s * width: off + (s + 1) * width]
        out = (xf - mean) * inv
    else:
        out = xf * inv
    o_ref[...] = out.astype(o_ref.dtype)


def _split_bf16(t_f32, nsplit):
    """Exact-ish 3-way bf16 decomposition: sum(components) == t_f32 to ~2^-27."""
    comps = []
    resid = t_f32
    for _ in range(nsplit):
        c = resid.astype(jnp.bfloat16)
        comps.append(c)
        resid = resid - c.astype(jnp.float32)
    return comps


def _choose_pack(num_envs, d, tasks_p, ncomp):
    """Largest lane-packing factor that (a) keeps reshapes free (divides num_envs),
    (b) fills 128 lanes, and (c) keeps the block-diagonal table VMEM-small."""
    if d >= 128 or 128 % d != 0:
        return 1
    p = 128 // d                                  # always a power of two
    while p > 1:
        width = p * d
        tab_bytes = (p * tasks_p) * (_NSPLIT * ncomp * width) * 2
        if num_envs % p == 0 and tab_bytes <= _MAX_TABLE_BYTES:
            return p
        p //= 2
    return 1


def per_task_empirical_normalize(x, task_ids, mean, std, *, eps=EPS, center=True):
    """Functional forward of PerTaskEmpiricalNormalization (eval semantics).

    x:        [num_envs, *shape]
    task_ids: [num_envs] int
    mean/std: [num_tasks, *shape]   (the module's _mean / _std buffers)
    returns   [num_envs, *shape] with x.dtype
    """
    orig_shape = x.shape
    num_envs = x.shape[0]
    d = 1
    for s in x.shape[1:]:
        d *= s
    x2 = x.reshape(num_envs, d)
    num_tasks = mean.shape[0]
    mean2 = mean.reshape(num_tasks, d).astype(jnp.float32)
    std2 = std.reshape(num_tasks, d).astype(jnp.float32)

    ncomp = 2 if center else 1
    tasks_p = _round_up(max(num_tasks, 1), 8)
    pack = _choose_pack(num_envs, d, tasks_p, ncomp)
    width = pack * d
    rows = num_envs // pack

    # --- tiny per-task tables (wrapper side, O(num_tasks * d)) ---------------
    inv_t = jnp.pad(1.0 / (std2 + eps), ((0, tasks_p - num_tasks), (0, 0)))
    tabs_f32 = [inv_t]
    if center:
        tabs_f32.append(jnp.pad(mean2, ((0, tasks_p - num_tasks), (0, 0))))
    if pack > 1:
        # Block-diagonal expansion: table[p*tasks_p + t, q*d + c] = (p == q) * tbl[t, c]
        eye = jnp.eye(pack, dtype=jnp.float32)
        tabs_f32 = [jnp.einsum("pq,td->ptqd", eye, t).reshape(pack * tasks_p, width)
                    for t in tabs_f32]
    comps = []
    for t in tabs_f32:
        comps.extend(_split_bf16(t, _NSPLIT))
    table = jnp.concatenate(comps, axis=1)        # (P, nsplit*ncomp*width) bf16

    # --- shifted task ids: packed position p indexes its own table-row block --
    tid = jnp.clip(task_ids.astype(jnp.int32), 0, num_tasks - 1)  # guard OOR ids
    tid2d = tid.reshape(rows, pack) + (jnp.arange(pack, dtype=jnp.int32) * tasks_p)[None, :]

    x_packed = x2.reshape(rows, width)            # free contiguous reshape; no jnp.pad

    # --- row blocking ---------------------------------------------------------
    bytes_per_row = width * x.dtype.itemsize
    block_rows = max(8, min(_BLOCK_ROWS_CAP, (_X_TILE_BYTES // bytes_per_row) // 8 * 8))
    if rows >= _MIN_GRID_STEPS * 128:
        # keep >= _MIN_GRID_STEPS steps so both v7x TCs get work and DMAs overlap
        block_rows = min(block_rows, _round_up(-(-rows // _MIN_GRID_STEPS), 8))
    block_rows = max(8, min(block_rows, _round_up(rows, 8)))
    grid = (pl.cdiv(rows, block_rows),)           # ragged last block handled by Pallas

    kernel = partial(_norm_kernel, pack=pack, width=width, nsplit=_NSPLIT, center=center)

    out = pl.pallas_call(
        kernel,
        grid=grid,
        in_specs=[
            pl.BlockSpec((block_rows, pack), lambda i: (i, 0)),      # shifted task ids
            pl.BlockSpec((block_rows, width), lambda i: (i, 0)),     # x rows
            pl.BlockSpec(table.shape, lambda i: (0, 0)),             # VMEM-resident table
        ],
        out_specs=pl.BlockSpec((block_rows, width), lambda i: (i, 0)),
        out_shape=jax.ShapeDtypeStruct((rows, width), x.dtype),
        compiler_params=pltpu.CompilerParams(
            dimension_semantics=("parallel",),    # rows independent across grid steps
            vmem_limit_bytes=32 * 1024 * 1024,    # explicit (v5e default is only 16 MiB)
        ),
    )(tid2d, x_packed, table)

    return out.reshape(orig_shape)


if __name__ == "__main__":
    key = jax.random.PRNGKey(0)
    k1, k2, k3, k4 = jax.random.split(key, 4)

    def ref_fn(x, tid, mean, std, center=True):
        m, s = mean[tid], std[tid]
        return (x - m) / (s + EPS) if center else x / (s + EPS)

    # 1) Packed path: D=32 -> 4 env rows folded per 128-lane row (pack | num_envs).
    num_tasks, num_envs, d = 4, 32, 32
    x = jax.random.normal(k1, (num_envs, d), dtype=jnp.float32)
    task_ids = jax.random.randint(k2, (num_envs,), 0, num_tasks, dtype=jnp.int32)
    mean = jax.random.normal(k3, (num_tasks, d), dtype=jnp.float32)
    std = jnp.abs(jax.random.normal(k4, (num_tasks, d), dtype=jnp.float32)) + 0.5

    out = jax.block_until_ready(per_task_empirical_normalize(x, task_ids, mean, std))
    assert out.shape == x.shape and out.dtype == x.dtype
    assert jnp.allclose(out, ref_fn(x, task_ids, mean, std), atol=1e-5, rtol=1e-5), \
        "mismatch (packed, center=True)"

    out_nc = jax.block_until_ready(
        per_task_empirical_normalize(x, task_ids, mean, std, center=False))
    assert jnp.allclose(out_nc, ref_fn(x, task_ids, mean, std, center=False),
                        atol=1e-5, rtol=1e-5), "mismatch (center=False)"

    # 2) Ragged env count: 30 % 4 != 0 -> pack falls back to 2; still no pad/slice copies.
    ne2 = 30
    x2 = jax.random.normal(k1, (ne2, d), dtype=jnp.float32)
    tid2 = jax.random.randint(k2, (ne2,), 0, num_tasks, dtype=jnp.int32)
    out2 = jax.block_until_ready(per_task_empirical_normalize(x2, tid2, mean, std))
    assert jnp.allclose(out2, ref_fn(x2, tid2, mean, std), atol=1e-5, rtol=1e-5), \
        "mismatch (ragged envs)"

    # 3) Lane-dense feature dim (D=128) with ragged rows -> partial last block in-kernel.
    d3 = 128
    x3 = jax.random.normal(k1, (ne2, d3), dtype=jnp.float32)
    mean3 = jax.random.normal(k3, (num_tasks, d3), dtype=jnp.float32)
    std3 = jnp.abs(jax.random.normal(k4, (num_tasks, d3), dtype=jnp.float32)) + 0.5
    out3 = jax.block_until_ready(per_task_empirical_normalize(x3, tid2, mean3, std3))
    assert jnp.allclose(out3, ref_fn(x3, tid2, mean3, std3), atol=1e-5, rtol=1e-5), \
        "mismatch (D=128)"

    print("KERNEL_OK")
</pallas_src>

<mosaic_0001>
module attributes {stable_mosaic.version = 11 : i64} {
  func.func @_norm_kernel(%arg0: i32, %arg1: memref<8x4xi32, #tpu.memory_space<vmem>>, %arg2: memref<8x128xf32, #tpu.memory_space<vmem>>, %arg3: memref<32x768xbf16, #tpu.memory_space<vmem>>, %arg4: memref<8x128xf32, #tpu.memory_space<vmem>>) attributes {dimension_semantics = [#tpu.dimension_semantics<parallel>], iteration_bounds = array<i64: 1>, scalar_prefetch = 0 : i64, scratch_operands = 0 : i64, tpu.core_type = #tpu.core_type<tc>, window_params = [{transform_indices = @transform_0, window_bounds = array<i64: 8, 4>}, {transform_indices = @transform_1, window_bounds = array<i64: 8, 128>}, {pipeline_mode = #tpu.pipeline_mode<synchronous>, transform_indices = @transform_2, window_bounds = array<i64: 32, 768>}, {transform_indices = @transform_3, window_bounds = array<i64: 8, 128>}]} {
    %0 = tpu.iota {dimensions = array<i32: 1>} : vector<8x32xi32>
    %c0 = arith.constant 0 : index
    %c0_0 = arith.constant 0 : index
    %1 = vector.load %arg1[%c0, %c0_0] : memref<8x4xi32, #tpu.memory_space<vmem>>, vector<8x1xi32>
    %2 = vector.broadcast %1 : vector<8x1xi32> to vector<8x32xi32>
    %3 = arith.cmpi eq, %2, %0 : vector<8x32xi32>
    %c0_1 = arith.constant 0 : index
    %c1 = arith.constant 1 : index
    %4 = vector.load %arg1[%c0_1, %c1] : memref<8x4xi32, #tpu.memory_space<vmem>>, vector<8x1xi32>
    %5 = vector.broadcast %4 : vector<8x1xi32> to vector<8x32xi32>
    %6 = arith.cmpi eq, %5, %0 : vector<8x32xi32>
    %7 = arith.ori %3, %6 : vector<8x32xi1>
    %c0_2 = arith.constant 0 : index
    %c2 = arith.constant 2 : index
    %8 = vector.load %arg1[%c0_2, %c2] : memref<8x4xi32, #tpu.memory_space<vmem>>, vector<8x1xi32>
    %9 = vector.broadcast %8 : vector<8x1xi32> to vector<8x32xi32>
    %10 = arith.cmpi eq, %9, %0 : vector<8x32xi32>
    %11 = arith.ori %7, %10 : vector<8x32xi1>
    %c0_3 = arith.constant 0 : index
    %c3 = arith.constant 3 : index
    %12 = vector.load %arg1[%c0_3, %c3] : memref<8x4xi32, #tpu.memory_space<vmem>>, vector<8x1xi32>
    %13 = vector.broadcast %12 : vector<8x1xi32> to vector<8x32xi32>
    %14 = arith.cmpi eq, %13, %0 : vector<8x32xi32>
    %15 = arith.ori %11, %14 : vector<8x32xi1>
    %16 = arith.extui %15 : vector<8x32xi1> to vector<8x32xi32>
    %17 = arith.sitofp %16 : vector<8x32xi32> to vector<8x32xf32>
    %18 = arith.truncf %17 : vector<8x32xf32> to vector<8x32xbf16>
    %c0_4 = arith.constant 0 : index
    %c0_5 = arith.constant 0 : index
    %19 = vector.load %arg3[%c0_4, %c0_5] : memref<32x768xbf16, #tpu.memory_space<vmem>>, vector<32x768xbf16>
    %cst = arith.constant dense<0.000000e+00> : vector<8x768xf32>
    %20 = tpu.matmul %18, %19, %cst {dimension_numbers = #tpu.dot_dimension_numbers<[1], [0], [0], [1], [0, 0, 1, 1], [], []>} : vector<8x32xbf16>, vector<32x768xbf16>, vector<8x768xf32> -> vector<8x768xf32>
    %21 = vector.extract_strided_slice %20 {offsets = [0, 0], sizes = [8, 128], strides = [1, 1]} : vector<8x768xf32> to vector<8x128xf32>
    %22 = vector.extract_strided_slice %20 {offsets = [0, 128], sizes = [8, 128], strides = [1, 1]} : vector<8x768xf32> to vector<8x128xf32>
    %23 = arith.addf %21, %22 : vector<8x128xf32>
    %24 = vector.extract_strided_slice %20 {offsets = [0, 256], sizes = [8, 128], strides = [1, 1]} : vector<8x768xf32> to vector<8x128xf32>
    %25 = arith.addf %23, %24 : vector<8x128xf32>
    %c0_6 = arith.constant 0 : index
    %c0_7 = arith.constant 0 : index
    %26 = vector.load %arg2[%c0_6, %c0_7] : memref<8x128xf32, #tpu.memory_space<vmem>>, vector<8x128xf32>
    %27 = vector.extract_strided_slice %20 {offsets = [0, 384], sizes = [8, 128], strides = [1, 1]} : vector<8x768xf32> to vector<8x128xf32>
    %28 = vector.extract_strided_slice %20 {offsets = [0, 512], sizes = [8, 128], strides = [1, 1]} : vector<8x768xf32> to vector<8x128xf32>
    %29 = arith.addf %27, %28 : vector<8x128xf32>
    %30 = vector.extract_strided_slice %20 {offsets = [0, 640], sizes = [8, 128], strides = [1, 1]} : vector<8x768xf32> to vector<8x128xf32>
    %31 = arith.addf %29, %30 : vector<8x128xf32>
    %32 = arith.subf %26, %31 : vector<8x128xf32>
    %33 = arith.mulf %32, %25 : vector<8x128xf32>
    %c0_8 = arith.constant 0 : index
    %c0_9 = arith.constant 0 : index
    %34 = vector.load %arg4[%c0_8, %c0_9] : memref<8x128xf32, #tpu.memory_space<vmem>>, vector<8x128xf32>
    tpu.vector_store %arg4[%c0_8, %c0_9], %33 {strides = array<i32>} : memref<8x128xf32, #tpu.memory_space<vmem>>, vector<8x128xf32>,
    return
  }
  func.func @transform_0(%arg0: i32) -> (i32, i32) {
    %c0_i32 = arith.constant 0 : i32
    %c0_i32_0 = arith.constant 0 : i32
    return %arg0, %c0_i32 : i32, i32
  }
  func.func @transform_1(%arg0: i32) -> (i32, i32) {
    %c0_i32 = arith.constant 0 : i32
    %c0_i32_0 = arith.constant 0 : i32
    return %arg0, %c0_i32 : i32, i32
  }
  func.func @transform_2(%arg0: i32) -> (i32, i32) {
    %c0_i32 = arith.constant 0 : i32
    %c0_i32_0 = arith.constant 0 : i32
    %c0_i32_1 = arith.constant 0 : i32
    return %c0_i32, %c0_i32_0 : i32, i32
  }
  func.func @transform_3(%arg0: i32) -> (i32, i32) {
    %c0_i32 = arith.constant 0 : i32
    %c0_i32_0 = arith.constant 0 : i32
    return %arg0, %c0_i32 : i32, i32
  }
}

</mosaic_0001>

<llo_original>
// kernel: tpu_custom_call.1
$region0: #{tpu_custom_call.1}
  #allocation0 [shape = 'u32[]', space=smem, size = 0x4, offset = 0x4, fixed_abs, tag = 'smem constant byte address 0x4 - core index']
  #allocation1 [shape = 'u32[144,128]{1,0:T(1,128)}', space=vmem, size = 0x12000, scoped, tag = 'internal scratch']
  %s0 = inlined_call_operand.vmem [shape: s32[8,4], index: 0, kind: input, shape index: {}]
  %s1 = inlined_call_operand.vmem [shape: f32[8,128], index: 1, kind: input, shape index: {}]
  %s2 = inlined_call_operand.hbm [shape: bf16[32,768], index: 2, kind: input, shape index: {}]
  %s3 = inlined_call_operand.hbm [shape: f32[8,128], index: 3, kind: output, shape index: {}]
  %s4 = sld [smem:[#allocation0]]
  $region26: #{tpu_custom_call.1} parent=0
    _
  %s6 = ssub.s32 1, %s4
  %s7 = scalar_select 0, %s6, %s4
  $region1: #{tpu_custom_call.1} parent=0
    #allocation2 [shape = 'u8[49152]{0}', space=vmem, size = 0xc000, scoped, tag = 'input window, operand 2, single buffered']
    #allocation3 [shape = 's32[1]{0}', space=sflag, size = 0x4, scoped, tag = 'scoped memory for tpu_custom_call.1']
    #allocation4 [shape = 's32[1]{0}', space=sflag, size = 0x4, scoped, tag = 'scoped memory for tpu_custom_call.1']
    #allocation5 [shape = 'u8[4096]{0}', space=vmem, size = 0x1000, scoped, tag = 'output window, operand 0, single buffered']
    %8 = vsyncpa [#allocation3], 0
    %9 = vsyncpa [#allocation4], 0
    // Predicated region
    $region2: #{tpu_custom_call.1} parent=1 // pred_check
      _
    $region3: #{tpu_custom_call.1} parent=1 // pred_check_branch
      %11 = sbr.rel (0) target = $region5
    $region4: #{tpu_custom_call.1} parent=1 // pred_region
      _
    $region5: #{tpu_custom_call.1} parent=1 // pred_fallthru
      _
    // Predicated region
    $region6: #{tpu_custom_call.1} parent=1 // pred_check
      _
    $region7: #{tpu_custom_call.1} parent=1 // pred_check_branch
      %13 = sbr.rel (0) target = $region9
    $region8: #{tpu_custom_call.1} parent=1 // pred_region
      _
    $region9: #{tpu_custom_call.1} parent=1 // pred_fallthru
      _
    // Predicated region
    $region10: #{tpu_custom_call.1} parent=1 // pred_check
      _
    $region11: #{tpu_custom_call.1} parent=1 // pred_check_branch
      %15 = sbr.rel (0) target = $region13
    $region12: #{tpu_custom_call.1} parent=1 // pred_region
      %s17 = ssub.s32 1536, 1536
      %18 = vsyncadd [#allocation3], %s17
      %s19 = sshll.u32 [#allocation2], 4
      %s20 = int_to_ptr.vmem [resolvable:$true] %s19
      %25 = dma.hbm_to_vmem [thread:$0]  %s2, 1536, %s20, [#allocation3], 384, 384, 24
    $region13: #{tpu_custom_call.1} parent=1 // pred_fallthru
      _
    // Predicated region
    $region14: #{tpu_custom_call.1} parent=1 // pred_check
      _
    $region15: #{tpu_custom_call.1} parent=1 // pred_check_branch
      %27 = sbr.rel (0) target = $region17
    $region16: #{tpu_custom_call.1} parent=1 // pred_region
      %28 = dma.done [#allocation3], 1536
    $region17: #{tpu_custom_call.1} parent=1 // pred_fallthru
      _
    %v30 = vlaneseq
    %v31 = vand.u32 %v30, 127
    %v32 = vld [vmem:[%s0] sm:$0xff]
    %33 = vset.pattern.permute.xlu0 0
    %34 = vperm.xlu0 %33, %v32
    %v35 = vpop.permute.xlu0 %34
    %vm36 = vcmp.eq.s32.totalorder %v35, %v31
    %37 = vset.pattern.permute.xlu0 1
    %38 = vperm.xlu0 %37, %v32
    %v39 = vpop.permute.xlu0 %38
    %vm40 = vcmp.eq.s32.totalorder %v39, %v31
    %vm41 = vmor %vm36, %vm40
    %42 = vset.pattern.permute.xlu0 2
    %43 = vperm.xlu0 %42, %v32
    %v44 = vpop.permute.xlu0 %43
    %vm45 = vcmp.eq.s32.totalorder %v44, %v31
    %vm46 = vmor %vm41, %vm45
    %47 = vset.pattern.permute.xlu0 3
    %48 = vperm.xlu0 %47, %v32
    %v49 = vpop.permute.xlu0 %48
    %vm50 = vcmp.eq.s32.totalorder %v49, %v31
    %vm51 = vmor %vm46, %vm50
    %v52 = vsel %vm51, 1, 0
    %v53 = vcvt.s32.f32 %v52
    %v54 = vpack.c.bf16 %v53, %v53
    %v55 = vld [vmem:[#allocation2] sm:$0xff]
    %v56 = vld [vmem:[#allocation2 + $0x8] sm:$0xff]
    %v57 = vld [vmem:[#allocation2 + $0x10] sm:$0xff]
    %v58 = vld [vmem:[#allocation2 + $0x18] sm:$0xff]
    %v59 = vld [vmem:[#allocation2 + $0x20] sm:$0xff]
    %v60 = vld [vmem:[#allocation2 + $0x28] sm:$0xff]
    %v61 = vld [vmem:[#allocation2 + $0x30] sm:$0xff]
    %v62 = vld [vmem:[#allocation2 + $0x38] sm:$0xff]
    %v63 = vld [vmem:[#allocation2 + $0x40] sm:$0xff]
    %v64 = vld [vmem:[#allocation2 + $0x48] sm:$0xff]
    %v65 = vld [vmem:[#allocation2 + $0x50] sm:$0xff]
    %v66 = vld [vmem:[#allocation2 + $0x58] sm:$0xff]
    %v79 = vunpack.c.l.b16 %v55
    %v80 = vunpack.c.h.b16 %v55
    %v81 = vunpack.c.l.b16 %v56
    %v82 = vunpack.c.h.b16 %v56
    %v83 = vunpack.c.l.b16 %v57
    %v84 = vunpack.c.h.b16 %v57
    %v85 = vunpack.c.l.b16 %v58
    %v86 = vunpack.c.h.b16 %v58
    %v87 = vunpack.c.l.b16 %v59
    %v88 = vunpack.c.h.b16 %v59
    %v89 = vunpack.c.l.b16 %v60
    %v90 = vunpack.c.h.b16 %v60
    %v91 = vunpack.c.l.b16 %v61
    %v92 = vunpack.c.h.b16 %v61
    %v93 = vunpack.c.l.b16 %v62
    %v94 = vunpack.c.h.b16 %v62
    %v95 = vunpack.c.l.b16 %v63
    %v96 = vunpack.c.h.b16 %v63
    %v97 = vunpack.c.l.b16 %v64
    %v98 = vunpack.c.h.b16 %v64
    %v99 = vunpack.c.l.b16 %v65
    %v100 = vunpack.c.h.b16 %v65
    %v101 = vunpack.c.l.b16 %v66
    %v102 = vunpack.c.h.b16 %v66
    %v103 = vpack.c.b16 %v85, %v79
    %v104 = vpack.c.b16 %v86, %v80
    %v105 = vpack.c.b16 %v87, %v81
    %v106 = vpack.c.b16 %v88, %v82
    %v107 = vpack.c.b16 %v89, %v83
    %v108 = vpack.c.b16 %v90, %v84
    %v109 = vpack.c.b16 %v97, %v91
    %v110 = vpack.c.b16 %v98, %v92
    %v111 = vpack.c.b16 %v99, %v93
    %v112 = vpack.c.b16 %v100, %v94
    %v113 = vpack.c.b16 %v101, %v95
    %v114 = vpack.c.b16 %v102, %v96
    %vm127 = vcmask 261120
    %v129 = vsel %vm127, %v54, 0
    %131 = vmatprep.subr.bf16.mxu0 %v104
    %132 = vmatpush1.bf16.msra.mxu0 %v103
    %133 = vmatprep.subr.bf16.mxu0 %v110
    %134 = vmatpush1.bf16.msra.mxu0 %v109
    %135 = vmatprep.subr.bf16.mxu0 0
    %136 = vmatpush1.bf16.msra.mxu0 0
    %137 = vmatprep.subr.bf16.mxu0 0
    %138 = vmatpush1.bf16.msra.mxu0 0
    %139 = vmatprep.subr.bf16.mxu0 0
    %140 = vmatpush1.bf16.msra.mxu0 0
    %141 = vmatprep.subr.bf16.mxu0 0
    %142 = vmatpush1.bf16.msra.mxu0 0
    %143 = vmatprep.subr.bf16.mxu0 0
    %144 = vmatpush1.bf16.msra.mxu0 0
    %145 = vmatprep.subr.bf16.mxu0 0
    %146 = vmatpush1.bf16.msra.mxu0 0
    %147 = vmatprep.subr.bf16.mxu0 0
    %148 = vmatpush1.bf16.msra.mxu0 0
    %149 = vmatprep.subr.bf16.mxu0 0
    %150 = vmatpush1.bf16.msra.mxu0 0
    %151 = vmatprep.subr.bf16.mxu0 0
    %152 = vmatpush1.bf16.msra.mxu0 0
    %153 = vmatprep.subr.bf16.mxu0 0
    %154 = vmatpush1.bf16.msra.mxu0 0
    %155 = vmatprep.subr.bf16.mxu0 0
    %156 = vmatpush1.bf16.msra.mxu0 0
    %157 = vmatprep.subr.bf16.mxu0 0
    %158 = vmatpush1.bf16.msra.mxu0 0
    %159 = vmatprep.subr.bf16.mxu0 0
    %160 = vmatpush1.bf16.msra.mxu0 0
    %161 = vmatprep.subr.bf16.mxu0 0
    %162 = vmatpush1.bf16.msra.mxu0 0
    %163 = vmatprep.mubr.bf16.mxu0 0
    %164 = vmatmul.mubr.bf16.gmra.mrb[0].mxu0 %v129
    %v165 = vpop.f32.mrb[0].mxu0
    %v166 = vadd.f32 0.0, %v165
    %v167 = vpop.f32.mrb[0].mxu0
    %v168 = vadd.f32 0.0, %v167
    %v169 = vpop.f32.mrb[0].mxu0
    %v170 = vpop.f32.mrb[0].mxu0
    %171 = vdwg.mxu0
    %172 = vmatprep.subr.bf16.mxu0 %v106
    %173 = vmatpush1.bf16.msra.mxu0 %v105
    %174 = vmatprep.subr.bf16.mxu0 %v112
    %175 = vmatpush1.bf16.msra.mxu0 %v111
    %176 = vmatprep.subr.bf16.mxu0 0
    %177 = vmatpush1.bf16.msra.mxu0 0
    %178 = vmatprep.subr.bf16.mxu0 0
    %179 = vmatpush1.bf16.msra.mxu0 0
    %180 = vmatprep.subr.bf16.mxu0 0
    %181 = vmatpush1.bf16.msra.mxu0 0
    %182 = vmatprep.subr.bf16.mxu0 0
    %183 = vmatpush1.bf16.msra.mxu0 0
    %184 = vmatprep.subr.bf16.mxu0 0
    %185 = vmatpush1.bf16.msra.mxu0 0
    %186 = vmatprep.subr.bf16.mxu0 0
    %187 = vmatpush1.bf16.msra.mxu0 0
    %188 = vmatprep.subr.bf16.mxu0 0
    %189 = vmatpush1.bf16.msra.mxu0 0
    %190 = vmatprep.subr.bf16.mxu0 0
    %191 = vmatpush1.bf16.msra.mxu0 0
    %192 = vmatprep.subr.bf16.mxu0 0
    %193 = vmatpush1.bf16.msra.mxu0 0
    %194 = vmatprep.subr.bf16.mxu0 0
    %195 = vmatpush1.bf16.msra.mxu0 0
    %196 = vmatprep.subr.bf16.mxu0 0
    %197 = vmatpush1.bf16.msra.mxu0 0
    %198 = vmatprep.subr.bf16.mxu0 0
    %199 = vmatpush1.bf16.msra.mxu0 0
    %200 = vmatprep.subr.bf16.mxu0 0
    %201 = vmatpush1.bf16.msra.mxu0 0
    %202 = vmatprep.subr.bf16.mxu0 0
    %203 = vmatpush1.bf16.msra.mxu0 0
    %204 = vmatprep.mubr.bf16.mxu0 0
    %205 = vmatmul.mubr.bf16.gmra.mrb[0].mxu0 %v129
    %v206 = vpop.f32.mrb[0].mxu0
    %v207 = vadd.f32 0.0, %v206
    %v208 = vpop.f32.mrb[0].mxu0
    %v209 = vadd.f32 0.0, %v208
    %v210 = vpop.f32.mrb[0].mxu0
    %v211 = vpop.f32.mrb[0].mxu0
    %212 = vdwg.mxu0
    %213 = vmatprep.subr.bf16.mxu0 %v108
    %214 = vmatpush1.bf16.msra.mxu0 %v107
    %215 = vmatprep.subr.bf16.mxu0 %v114
    %216 = vmatpush1.bf16.msra.mxu0 %v113
    %217 = vmatprep.subr.bf16.mxu0 0
    %218 = vmatpush1.bf16.msra.mxu0 0
    %219 = vmatprep.subr.bf16.mxu0 0
    %220 = vmatpush1.bf16.msra.mxu0 0
    %221 = vmatprep.subr.bf16.mxu0 0
    %222 = vmatpush1.bf16.msra.mxu0 0
    %223 = vmatprep.subr.bf16.mxu0 0
    %224 = vmatpush1.bf16.msra.mxu0 0
    %225 = vmatprep.subr.bf16.mxu0 0
    %226 = vmatpush1.bf16.msra.mxu0 0
    %227 = vmatprep.subr.bf16.mxu0 0
    %228 = vmatpush1.bf16.msra.mxu0 0
    %229 = vmatprep.subr.bf16.mxu0 0
    %230 = vmatpush1.bf16.msra.mxu0 0
    %231 = vmatprep.subr.bf16.mxu0 0
    %232 = vmatpush1.bf16.msra.mxu0 0
    %233 = vmatprep.subr.bf16.mxu0 0
    %234 = vmatpush1.bf16.msra.mxu0 0
    %235 = vmatprep.subr.bf16.mxu0 0
    %236 = vmatpush1.bf16.msra.mxu0 0
    %237 = vmatprep.subr.bf16.mxu0 0
    %238 = vmatpush1.bf16.msra.mxu0 0
    %239 = vmatprep.subr.bf16.mxu0 0
    %240 = vmatpush1.bf16.msra.mxu0 0
    %241 = vmatprep.subr.bf16.mxu0 0
    %242 = vmatpush1.bf16.msra.mxu0 0
    %243 = vmatprep.subr.bf16.mxu0 0
    %244 = vmatpush1.bf16.msra.mxu0 0
    %245 = vmatprep.mubr.bf16.mxu0 0
    %246 = vmatmul.mubr.bf16.gmra.mrb[0].mxu0 %v129
    %v247 = vpop.f32.mrb[0].mxu0
    %v248 = vadd.f32 0.0, %v247
    %v249 = vpop.f32.mrb[0].mxu0
    %v250 = vadd.f32 0.0, %v249
    %v251 = vpop.f32.mrb[0].mxu0
    %v252 = vpop.f32.mrb[0].mxu0
    %253 = vdwg.mxu0
    %v254 = vadd.f32 %v166, %v168
    %v255 = vadd.f32 %v254, %v207
    %v256 = vld [vmem:[%s1] sm:$0xff]
    %v257 = vadd.f32 %v209, %v248
    %v258 = vadd.f32 %v257, %v250
    %v259 = vsub.f32 %v256, %v258
    %v260 = vmul.f32 %v259, %v255
    %261 = vst [vmem:[#allocation5] sm:$0xff] %v260
    // Predicated region
    $region18: #{tpu_custom_call.1} parent=1 // pred_check
      _
    $region19: #{tpu_custom_call.1} parent=1 // pred_check_branch
      %263 = sbr.rel (0) target = $region21
    $region20: #{tpu_custom_call.1} parent=1 // pred_region
      %s265 = ssub.s32 128, 128
      %266 = vsyncadd [#allocation4], %s265
      %s268 = sshll.u32 [#allocation5], 4
      %s269 = int_to_ptr.vmem [resolvable:$true] %s268
      %271 = dma.vmem_to_hbm [thread:$0]  %s269, 128, %s3, [#allocation4]
    $region21: #{tpu_custom_call.1} parent=1 // pred_fallthru
      _
    // Predicated region
    $region22: #{tpu_custom_call.1} parent=1 // pred_check
      _
    $region23: #{tpu_custom_call.1} parent=1 // pred_check_branch
      %273 = sbr.rel (0) target = $region25
    $region24: #{tpu_custom_call.1} parent=1 // pred_region
      %274 = dma.done [#allocation4], 128
    $region25: #{tpu_custom_call.1} parent=1 // pred_fallthru
      _
    %275 = vsyncpa [#allocation3], 1
    %276 = vsyncpa [#allocation4], 1

</llo_original>
